<compile_context>
chip_gen: v7x
topology: tpu7x:2x2x1
jax: 0.10.0
libtpu: 0.0.40
codegen_flags: <defaults>
</compile_context>

<pallas_src>
import jax
import jax.numpy as jnp
from jax.experimental import pallas as pl
from jax.experimental.pallas import tpu as pltpu


def decision_embedding_kernel(
    state_ref, action_ref, returns_ref, tstep_ref,
    ws_ref, bs_ref, wa_ref, ba_ref, wr_ref, br_ref,
    emb_ref, gamma_ref, beta_ref,
    out_ref,
):
    eps = 1e-5
    rows = state_ref.shape[0]          # T-tile size
    max_ep_len, model_dim = emb_ref.shape

    # --- timestep embedding lookup as a one-hot matmul on the MXU ---
    t_ids = tstep_ref[...]                                         # (rows, 1) i32
    iota = jax.lax.broadcasted_iota(jnp.int32, (rows, max_ep_len), 1)
    one_hot = (t_ids == iota).astype(jnp.float32)                  # (rows, L)
    t_emb = jnp.dot(one_hot, emb_ref[...],
                    preferred_element_type=jnp.float32)            # (rows, D)

    # --- per-modality linear embeds (+ timestep add) ---
    s_emb = jnp.dot(state_ref[...], ws_ref[...],
                    preferred_element_type=jnp.float32) + (bs_ref[...] + t_emb)
    a_emb = jnp.dot(action_ref[...], wa_ref[...],
                    preferred_element_type=jnp.float32) + (ba_ref[...] + t_emb)
    # Linear(1, D): (rows, 1) * (1, D) broadcast outer-product on the VPU.
    r_emb = returns_ref[...] * wr_ref[...] + (br_ref[...] + t_emb)

    # Hoisted broadcasts: reused by all three LayerNorms.
    gamma = jnp.broadcast_to(gamma_ref[...], (rows, model_dim))
    beta = jnp.broadcast_to(beta_ref[...], (rows, model_dim))

    def layer_norm(x):
        mu = jnp.mean(x, axis=-1, keepdims=True)
        var = jnp.mean(jnp.square(x - mu), axis=-1, keepdims=True)
        inv = jax.lax.rsqrt(var + eps)
        return (x - mu) * inv * gamma + beta

    # torch.stack([returns, state, action], dim=1) order; out_ref is (3, TT, D).
    out_ref[0] = layer_norm(r_emb)
    out_ref[1] = layer_norm(s_emb)
    out_ref[2] = layer_norm(a_emb)


def _pick_t_tile(T, state_dim, act_dim, D, max_ep_len):
    """Largest T-tile (multiple of 8, <=512) fitting a conservative VMEM budget."""
    # Resident, tile-independent bytes: weights, biases, gamma/beta, emb table.
    param_bytes = 4 * (state_dim + act_dim + 1 + 3 + max_ep_len) * D
    budget = 44 * 1024 * 1024 - param_bytes
    # Per-row bytes: double-buffered inputs + double-buffered output block
    # + one-hot + f32 temporaries inside the kernel.
    per_row = 4 * (2 * (state_dim + act_dim + 2) + 2 * 3 * D + max_ep_len + 8 * D)
    cap = max(8, budget // max(per_row, 1))
    tile = int(min(T, 512, cap))
    if tile < T:
        tile = max(8, (tile // 8) * 8)
    return tile


def decision_embedding(state, action, returns, timestep, params, *, t_tile=None):
    """state: (B,T,S), action: (B,T,A), returns: (B,T,1), timestep: (B,T) int.

    Returns (B, 3, T, D) with stack order (returns, state, action), matching
    torch.stack(..., dim=1) followed by LayerNorm(model_dim).
    """
    B, T, state_dim = state.shape
    act_dim = action.shape[-1]
    D = params["ws"].shape[1]
    max_ep_len = params["emb"].shape[0]

    if t_tile is None:
        t_tile = _pick_t_tile(T, state_dim, act_dim, D, max_ep_len)
    TT = t_tile

    state = state.astype(jnp.float32)
    action = action.astype(jnp.float32)
    returns = returns.astype(jnp.float32)
    tstep3 = timestep.reshape(B, T, 1).astype(jnp.int32)

    grid = (B, pl.cdiv(T, TT))

    # Per-(batch, T-tile) blocked inputs; leading batch dim squeezed away.
    def row_spec(feat):
        return pl.BlockSpec((None, TT, feat), lambda b, t: (b, t, 0))

    # Parameters: full-array blocks with constant index maps -> stay resident
    # in VMEM across grid iterations (no re-DMA).
    def const_spec(arr):
        n = arr.ndim
        return pl.BlockSpec(arr.shape, lambda b, t, _n=n: (0,) * _n)

    in_specs = [
        row_spec(state_dim),       # state
        row_spec(act_dim),         # action
        row_spec(1),               # returns
        row_spec(1),               # timestep
        const_spec(params["ws"]), const_spec(params["bs"]),
        const_spec(params["wa"]), const_spec(params["ba"]),
        const_spec(params["wr"]), const_spec(params["br"]),
        const_spec(params["emb"]),
        const_spec(params["gamma"]), const_spec(params["beta"]),
    ]

    # Output written directly in final (B, 3, T, D) layout (lane-dense D last).
    out_spec = pl.BlockSpec((None, 3, TT, D), lambda b, t: (b, 0, t, 0))

    # Generation-safe scoped-VMEM limit (v5e default is only 16 MiB; v7x has
    # 64 MiB physical): estimate of double-buffered blocks + params + in-kernel
    # temporaries, with headroom, clamped to <= 56 MiB.
    est_bytes = 4 * (
        2 * TT * (state_dim + act_dim + 2)                      # inputs x2 bufs
        + 2 * 3 * TT * D                                        # output x2 bufs
        + 2 * (state_dim + act_dim + 4 + max_ep_len) * D        # params
        + TT * max_ep_len + 8 * TT * D                          # one-hot + temps
    )
    vmem_limit = int(min(max(2 * est_bytes, 16 * 1024 * 1024), 56 * 1024 * 1024))

    out = pl.pallas_call(
        decision_embedding_kernel,
        out_shape=jax.ShapeDtypeStruct((B, 3, T, D), jnp.float32),
        grid=grid,
        in_specs=in_specs,
        out_specs=out_spec,
        compiler_params=pltpu.CompilerParams(
            dimension_semantics=("parallel", "parallel"),
            vmem_limit_bytes=vmem_limit,
        ),
    )(state, action, returns, tstep3,
      params["ws"], params["bs"], params["wa"], params["ba"],
      params["wr"], params["br"], params["emb"],
      params["gamma"], params["beta"])

    return out


def reference(state, action, returns, timestep, params):
    t_emb = params["emb"][timestep]                               # (B,T,D)
    s = state @ params["ws"] + params["bs"][0] + t_emb
    a = action @ params["wa"] + params["ba"][0] + t_emb
    r = returns @ params["wr"] + params["br"][0] + t_emb
    stacked = jnp.stack([r, s, a], axis=1)                        # (B,3,T,D)
    mu = stacked.mean(-1, keepdims=True)
    var = jnp.square(stacked - mu).mean(-1, keepdims=True)
    return ((stacked - mu) / jnp.sqrt(var + 1e-5)) * params["gamma"][0] \
        + params["beta"][0]


if __name__ == "__main__":
    B, T = 2, 8
    state_dim, act_dim = 16, 8
    max_ep_len = 64
    model_dim = 128

    key = jax.random.PRNGKey(0)
    keys = jax.random.split(key, 10)

    # Deterministic synthetic parameters (PyTorch shapes are (out,in); we store
    # the transposed (in,out) so the kernel does x @ W directly).
    params = {
        "ws": 0.05 * jax.random.normal(keys[0], (state_dim, model_dim), jnp.float32),
        "bs": 0.01 * jax.random.normal(keys[1], (1, model_dim), jnp.float32),
        "wa": 0.05 * jax.random.normal(keys[2], (act_dim, model_dim), jnp.float32),
        "ba": 0.01 * jax.random.normal(keys[3], (1, model_dim), jnp.float32),
        "wr": 0.05 * jax.random.normal(keys[4], (1, model_dim), jnp.float32),
        "br": 0.01 * jax.random.normal(keys[5], (1, model_dim), jnp.float32),
        "emb": 0.05 * jax.random.normal(keys[6], (max_ep_len, model_dim), jnp.float32),
        "gamma": jnp.ones((1, model_dim), jnp.float32),
        "beta": jnp.zeros((1, model_dim), jnp.float32),
    }

    ikeys = jax.random.split(keys[7], 4)
    state = jax.random.normal(ikeys[0], (B, T, state_dim), jnp.float32)
    action = jax.random.normal(ikeys[1], (B, T, act_dim), jnp.float32)
    returns = jax.random.normal(ikeys[2], (B, T, 1), jnp.float32)
    timestep = jax.random.randint(ikeys[3], (B, T), 0, max_ep_len, jnp.int32)

    out = decision_embedding(state, action, returns, timestep, params)
    out = jax.block_until_ready(out)

    ref = reference(state, action, returns, timestep, params)
    assert out.shape == (B, 3, T, model_dim), out.shape
    assert jnp.allclose(out, ref, atol=1e-4, rtol=1e-4), \
        float(jnp.max(jnp.abs(out - ref)))

    print("KERNEL_OK")
</pallas_src>

<mosaic_0001>
module attributes {stable_mosaic.version = 11 : i64} {
  func.func @decision_embedding_kernel(%arg0: i32, %arg1: i32, %arg2: memref<1x8x16xf32, #tpu.memory_space<vmem>>, %arg3: memref<1x8x8xf32, #tpu.memory_space<vmem>>, %arg4: memref<1x8x1xf32, #tpu.memory_space<vmem>>, %arg5: memref<1x8x1xi32, #tpu.memory_space<vmem>>, %arg6: memref<16x128xf32, #tpu.memory_space<vmem>>, %arg7: memref<1x128xf32, #tpu.memory_space<vmem>>, %arg8: memref<8x128xf32, #tpu.memory_space<vmem>>, %arg9: memref<1x128xf32, #tpu.memory_space<vmem>>, %arg10: memref<1x128xf32, #tpu.memory_space<vmem>>, %arg11: memref<1x128xf32, #tpu.memory_space<vmem>>, %arg12: memref<64x128xf32, #tpu.memory_space<vmem>>, %arg13: memref<1x128xf32, #tpu.memory_space<vmem>>, %arg14: memref<1x128xf32, #tpu.memory_space<vmem>>, %arg15: memref<1x3x8x128xf32, #tpu.memory_space<vmem>>) attributes {dimension_semantics = [#tpu.dimension_semantics<parallel>, #tpu.dimension_semantics<parallel>], iteration_bounds = array<i64: 2, 1>, scalar_prefetch = 0 : i64, scratch_operands = 0 : i64, tpu.core_type = #tpu.core_type<tc>, window_params = [{transform_indices = @transform_0, window_bounds = array<i64: 1, 8, 16>}, {transform_indices = @transform_1, window_bounds = array<i64: 1, 8, 8>}, {transform_indices = @transform_2, window_bounds = array<i64: 1, 8, 1>}, {transform_indices = @transform_3, window_bounds = array<i64: 1, 8, 1>}, {pipeline_mode = #tpu.pipeline_mode<synchronous>, transform_indices = @transform_4, window_bounds = array<i64: 16, 128>}, {pipeline_mode = #tpu.pipeline_mode<synchronous>, transform_indices = @transform_5, window_bounds = array<i64: 1, 128>}, {pipeline_mode = #tpu.pipeline_mode<synchronous>, transform_indices = @transform_6, window_bounds = array<i64: 8, 128>}, {pipeline_mode = #tpu.pipeline_mode<synchronous>, transform_indices = @transform_7, window_bounds = array<i64: 1, 128>}, {pipeline_mode = #tpu.pipeline_mode<synchronous>, transform_indices = @transform_8, window_bounds = array<i64: 1, 128>}, {pipeline_mode = #tpu.pipeline_mode<synchronous>, transform_indices = @transform_9, window_bounds = array<i64: 1, 128>}, {pipeline_mode = #tpu.pipeline_mode<synchronous>, transform_indices = @transform_10, window_bounds = array<i64: 64, 128>}, {pipeline_mode = #tpu.pipeline_mode<synchronous>, transform_indices = @transform_11, window_bounds = array<i64: 1, 128>}, {pipeline_mode = #tpu.pipeline_mode<synchronous>, transform_indices = @transform_12, window_bounds = array<i64: 1, 128>}, {transform_indices = @transform_13, window_bounds = array<i64: 1, 3, 8, 128>}]} {
    %c0 = arith.constant 0 : index
    %c0_0 = arith.constant 0 : index
    %c0_1 = arith.constant 0 : index
    %0 = vector.load %arg5[%c0, %c0_0, %c0_1] : memref<1x8x1xi32, #tpu.memory_space<vmem>>, vector<1x8x1xi32>
    %1 = vector.shape_cast %0 : vector<1x8x1xi32> to vector<8x1xi32>
    %2 = tpu.iota {dimensions = array<i32: 1>} : vector<8x64xi32>
    %3 = vector.broadcast %1 : vector<8x1xi32> to vector<8x64xi32>
    %4 = arith.cmpi eq, %3, %2 : vector<8x64xi32>
    %5 = arith.extui %4 : vector<8x64xi1> to vector<8x64xi32>
    %6 = arith.sitofp %5 : vector<8x64xi32> to vector<8x64xf32>
    %c0_2 = arith.constant 0 : index
    %c0_3 = arith.constant 0 : index
    %7 = vector.load %arg12[%c0_2, %c0_3] : memref<64x128xf32, #tpu.memory_space<vmem>>, vector<64x128xf32>
    %cst = arith.constant dense<0.000000e+00> : vector<8x128xf32>
    %8 = tpu.matmul %6, %7, %cst {dimension_numbers = #tpu.dot_dimension_numbers<[1], [0], [0], [1], [0, 0, 1, 1], [], []>} : vector<8x64xf32>, vector<64x128xf32>, vector<8x128xf32> -> vector<8x128xf32>
    %c0_4 = arith.constant 0 : index
    %c0_5 = arith.constant 0 : index
    %c0_6 = arith.constant 0 : index
    %9 = vector.load %arg2[%c0_4, %c0_5, %c0_6] : memref<1x8x16xf32, #tpu.memory_space<vmem>>, vector<1x8x16xf32>
    %10 = vector.shape_cast %9 : vector<1x8x16xf32> to vector<8x16xf32>
    %c0_7 = arith.constant 0 : index
    %c0_8 = arith.constant 0 : index
    %11 = vector.load %arg6[%c0_7, %c0_8] : memref<16x128xf32, #tpu.memory_space<vmem>>, vector<16x128xf32>
    %cst_9 = arith.constant dense<0.000000e+00> : vector<8x128xf32>
    %12 = tpu.matmul %10, %11, %cst_9 {dimension_numbers = #tpu.dot_dimension_numbers<[1], [0], [0], [1], [0, 0, 1, 1], [], []>} : vector<8x16xf32>, vector<16x128xf32>, vector<8x128xf32> -> vector<8x128xf32>
    %c0_10 = arith.constant 0 : index
    %c0_11 = arith.constant 0 : index
    %13 = vector.load %arg7[%c0_10, %c0_11] : memref<1x128xf32, #tpu.memory_space<vmem>>, vector<1x128xf32>
    %14 = vector.broadcast %13 : vector<1x128xf32> to vector<8x128xf32>
    %15 = arith.addf %14, %8 : vector<8x128xf32>
    %16 = arith.addf %12, %15 : vector<8x128xf32>
    %c0_12 = arith.constant 0 : index
    %c0_13 = arith.constant 0 : index
    %c0_14 = arith.constant 0 : index
    %17 = vector.load %arg3[%c0_12, %c0_13, %c0_14] : memref<1x8x8xf32, #tpu.memory_space<vmem>>, vector<1x8x8xf32>
    %18 = vector.shape_cast %17 : vector<1x8x8xf32> to vector<8x8xf32>
    %c0_15 = arith.constant 0 : index
    %c0_16 = arith.constant 0 : index
    %19 = vector.load %arg8[%c0_15, %c0_16] : memref<8x128xf32, #tpu.memory_space<vmem>>, vector<8x128xf32>
    %cst_17 = arith.constant dense<0.000000e+00> : vector<8x128xf32>
    %20 = tpu.matmul %18, %19, %cst_17 {dimension_numbers = #tpu.dot_dimension_numbers<[1], [0], [0], [1], [0, 0, 1, 1], [], []>} : vector<8x8xf32>, vector<8x128xf32>, vector<8x128xf32> -> vector<8x128xf32>
    %c0_18 = arith.constant 0 : index
    %c0_19 = arith.constant 0 : index
    %21 = vector.load %arg9[%c0_18, %c0_19] : memref<1x128xf32, #tpu.memory_space<vmem>>, vector<1x128xf32>
    %22 = vector.broadcast %21 : vector<1x128xf32> to vector<8x128xf32>
    %23 = arith.addf %22, %8 : vector<8x128xf32>
    %24 = arith.addf %20, %23 : vector<8x128xf32>
    %c0_20 = arith.constant 0 : index
    %c0_21 = arith.constant 0 : index
    %c0_22 = arith.constant 0 : index
    %25 = vector.load %arg4[%c0_20, %c0_21, %c0_22] : memref<1x8x1xf32, #tpu.memory_space<vmem>>, vector<1x8x1xf32>
    %26 = vector.shape_cast %25 : vector<1x8x1xf32> to vector<8x1xf32>
    %c0_23 = arith.constant 0 : index
    %c0_24 = arith.constant 0 : index
    %27 = vector.load %arg10[%c0_23, %c0_24] : memref<1x128xf32, #tpu.memory_space<vmem>>, vector<1x128xf32>
    %28 = vector.broadcast %26 : vector<8x1xf32> to vector<8x128xf32>
    %29 = vector.broadcast %27 : vector<1x128xf32> to vector<8x128xf32>
    %30 = arith.mulf %28, %29 : vector<8x128xf32>
    %c0_25 = arith.constant 0 : index
    %c0_26 = arith.constant 0 : index
    %31 = vector.load %arg11[%c0_25, %c0_26] : memref<1x128xf32, #tpu.memory_space<vmem>>, vector<1x128xf32>
    %32 = vector.broadcast %31 : vector<1x128xf32> to vector<8x128xf32>
    %33 = arith.addf %32, %8 : vector<8x128xf32>
    %34 = arith.addf %30, %33 : vector<8x128xf32>
    %c0_27 = arith.constant 0 : index
    %c0_28 = arith.constant 0 : index
    %35 = vector.load %arg13[%c0_27, %c0_28] : memref<1x128xf32, #tpu.memory_space<vmem>>, vector<1x128xf32>
    %36 = vector.shape_cast %35 : vector<1x128xf32> to vector<1x128xf32>
    %37 = vector.broadcast %36 : vector<1x128xf32> to vector<8x128xf32>
    %c0_29 = arith.constant 0 : index
    %c0_30 = arith.constant 0 : index
    %38 = vector.load %arg14[%c0_29, %c0_30] : memref<1x128xf32, #tpu.memory_space<vmem>>, vector<1x128xf32>
    %39 = vector.shape_cast %38 : vector<1x128xf32> to vector<1x128xf32>
    %40 = vector.broadcast %39 : vector<1x128xf32> to vector<8x128xf32>
    %cst_31 = arith.constant dense<0.000000e+00> : vector<8xf32>
    %41 = vector.multi_reduction <add>, %34, %cst_31 [1] : vector<8x128xf32> to vector<8xf32>
    %42 = vector.shape_cast %41 : vector<8xf32> to vector<8x1xf32>
    %cst_32 = arith.constant 1.280000e+02 : f32
    %43 = vector.broadcast %cst_32 : f32 to vector<8x1xf32>
    %44 = arith.divf %42, %43 : vector<8x1xf32>
    %45 = vector.broadcast %44 : vector<8x1xf32> to vector<8x128xf32>
    %46 = arith.subf %34, %45 : vector<8x128xf32>
    %47 = arith.mulf %46, %46 : vector<8x128xf32>
    %cst_33 = arith.constant dense<0.000000e+00> : vector<8xf32>
    %48 = vector.multi_reduction <add>, %47, %cst_33 [1] : vector<8x128xf32> to vector<8xf32>
    %49 = vector.shape_cast %48 : vector<8xf32> to vector<8x1xf32>
    %cst_34 = arith.constant 1.280000e+02 : f32
    %50 = vector.broadcast %cst_34 : f32 to vector<8x1xf32>
    %51 = arith.divf %49, %50 : vector<8x1xf32>
    %cst_35 = arith.constant 9.99999974E-6 : f32
    %52 = vector.broadcast %cst_35 : f32 to vector<8x1xf32>
    %53 = arith.addf %51, %52 : vector<8x1xf32>
    %54 = math.rsqrt %53 : vector<8x1xf32>
    %55 = vector.broadcast %44 : vector<8x1xf32> to vector<8x128xf32>
    %56 = arith.subf %34, %55 : vector<8x128xf32>
    %57 = vector.broadcast %54 : vector<8x1xf32> to vector<8x128xf32>
    %58 = arith.mulf %56, %57 : vector<8x128xf32>
    %59 = arith.mulf %58, %37 : vector<8x128xf32>
    %60 = arith.addf %59, %40 : vector<8x128xf32>
    %c0_36 = arith.constant 0 : index
    %c0_37 = arith.constant 0 : index
    %c0_38 = arith.constant 0 : index
    %c0_39 = arith.constant 0 : index
    %61 = vector.load %arg15[%c0_36, %c0_37, %c0_38, %c0_39] : memref<1x3x8x128xf32, #tpu.memory_space<vmem>>, vector<1x1x8x128xf32>
    %62 = vector.shape_cast %61 : vector<1x1x8x128xf32> to vector<8x128xf32>
    %63 = vector.shape_cast %60 : vector<8x128xf32> to vector<1x1x8x128xf32>
    tpu.vector_store %arg15[%c0_36, %c0_37, %c0_38, %c0_39], %63 {strides = array<i32>} : memref<1x3x8x128xf32, #tpu.memory_space<vmem>>, vector<1x1x8x128xf32>,
    %cst_40 = arith.constant dense<0.000000e+00> : vector<8xf32>
    %64 = vector.multi_reduction <add>, %16, %cst_40 [1] : vector<8x128xf32> to vector<8xf32>
    %65 = vector.shape_cast %64 : vector<8xf32> to vector<8x1xf32>
    %cst_41 = arith.constant 1.280000e+02 : f32
    %66 = vector.broadcast %cst_41 : f32 to vector<8x1xf32>
    %67 = arith.divf %65, %66 : vector<8x1xf32>
    %68 = vector.broadcast %67 : vector<8x1xf32> to vector<8x128xf32>
    %69 = arith.subf %16, %68 : vector<8x128xf32>
    %70 = arith.mulf %69, %69 : vector<8x128xf32>
    %cst_42 = arith.constant dense<0.000000e+00> : vector<8xf32>
    %71 = vector.multi_reduction <add>, %70, %cst_42 [1] : vector<8x128xf32> to vector<8xf32>
    %72 = vector.shape_cast %71 : vector<8xf32> to vector<8x1xf32>
    %cst_43 = arith.constant 1.280000e+02 : f32
    %73 = vector.broadcast %cst_43 : f32 to vector<8x1xf32>
    %74 = arith.divf %72, %73 : vector<8x1xf32>
    %cst_44 = arith.constant 9.99999974E-6 : f32
    %75 = vector.broadcast %cst_44 : f32 to vector<8x1xf32>
    %76 = arith.addf %74, %75 : vector<8x1xf32>
    %77 = math.rsqrt %76 : vector<8x1xf32>
    %78 = vector.broadcast %67 : vector<8x1xf32> to vector<8x128xf32>
    %79 = arith.subf %16, %78 : vector<8x128xf32>
    %80 = vector.broadcast %77 : vector<8x1xf32> to vector<8x128xf32>
    %81 = arith.mulf %79, %80 : vector<8x128xf32>
    %82 = arith.mulf %81, %37 : vector<8x128xf32>
    %83 = arith.addf %82, %40 : vector<8x128xf32>
    %c0_45 = arith.constant 0 : index
    %c1 = arith.constant 1 : index
    %c0_46 = arith.constant 0 : index
    %c0_47 = arith.constant 0 : index
    %84 = vector.load %arg15[%c0_45, %c1, %c0_46, %c0_47] : memref<1x3x8x128xf32, #tpu.memory_space<vmem>>, vector<1x1x8x128xf32>
    %85 = vector.shape_cast %84 : vector<1x1x8x128xf32> to vector<8x128xf32>
    %86 = vector.shape_cast %83 : vector<8x128xf32> to vector<1x1x8x128xf32>
    tpu.vector_store %arg15[%c0_45, %c1, %c0_46, %c0_47], %86 {strides = array<i32>} : memref<1x3x8x128xf32, #tpu.memory_space<vmem>>, vector<1x1x8x128xf32>,
    %cst_48 = arith.constant dense<0.000000e+00> : vector<8xf32>
    %87 = vector.multi_reduction <add>, %24, %cst_48 [1] : vector<8x128xf32> to vector<8xf32>
    %88 = vector.shape_cast %87 : vector<8xf32> to vector<8x1xf32>
    %cst_49 = arith.constant 1.280000e+02 : f32
    %89 = vector.broadcast %cst_49 : f32 to vector<8x1xf32>
    %90 = arith.divf %88, %89 : vector<8x1xf32>
    %91 = vector.broadcast %90 : vector<8x1xf32> to vector<8x128xf32>
    %92 = arith.subf %24, %91 : vector<8x128xf32>
    %93 = arith.mulf %92, %92 : vector<8x128xf32>
    %cst_50 = arith.constant dense<0.000000e+00> : vector<8xf32>
    %94 = vector.multi_reduction <add>, %93, %cst_50 [1] : vector<8x128xf32> to vector<8xf32>
    %95 = vector.shape_cast %94 : vector<8xf32> to vector<8x1xf32>
    %cst_51 = arith.constant 1.280000e+02 : f32
    %96 = vector.broadcast %cst_51 : f32 to vector<8x1xf32>
    %97 = arith.divf %95, %96 : vector<8x1xf32>
    %cst_52 = arith.constant 9.99999974E-6 : f32
    %98 = vector.broadcast %cst_52 : f32 to vector<8x1xf32>
    %99 = arith.addf %97, %98 : vector<8x1xf32>
    %100 = math.rsqrt %99 : vector<8x1xf32>
    %101 = vector.broadcast %90 : vector<8x1xf32> to vector<8x128xf32>
    %102 = arith.subf %24, %101 : vector<8x128xf32>
    %103 = vector.broadcast %100 : vector<8x1xf32> to vector<8x128xf32>
    %104 = arith.mulf %102, %103 : vector<8x128xf32>
    %105 = arith.mulf %104, %37 : vector<8x128xf32>
    %106 = arith.addf %105, %40 : vector<8x128xf32>
    %c0_53 = arith.constant 0 : index
    %c2 = arith.constant 2 : index
    %c0_54 = arith.constant 0 : index
    %c0_55 = arith.constant 0 : index
    %107 = vector.load %arg15[%c0_53, %c2, %c0_54, %c0_55] : memref<1x3x8x128xf32, #tpu.memory_space<vmem>>, vector<1x1x8x128xf32>
    %108 = vector.shape_cast %107 : vector<1x1x8x128xf32> to vector<8x128xf32>
    %109 = vector.shape_cast %106 : vector<8x128xf32> to vector<1x1x8x128xf32>
    tpu.vector_store %arg15[%c0_53, %c2, %c0_54, %c0_55], %109 {strides = array<i32>} : memref<1x3x8x128xf32, #tpu.memory_space<vmem>>, vector<1x1x8x128xf32>,
    return
  }
  func.func @transform_0(%arg0: i32, %arg1: i32) -> (i32, i32, i32) {
    %c0_i32 = arith.constant 0 : i32
    %c0_i32_0 = arith.constant 0 : i32
    return %arg0, %arg1, %c0_i32 : i32, i32, i32
  }
  func.func @transform_1(%arg0: i32, %arg1: i32) -> (i32, i32, i32) {
    %c0_i32 = arith.constant 0 : i32
    %c0_i32_0 = arith.constant 0 : i32
    return %arg0, %arg1, %c0_i32 : i32, i32, i32
  }
  func.func @transform_2(%arg0: i32, %arg1: i32) -> (i32, i32, i32) {
    %c0_i32 = arith.constant 0 : i32
    %c0_i32_0 = arith.constant 0 : i32
    return %arg0, %arg1, %c0_i32 : i32, i32, i32
  }
  func.func @transform_3(%arg0: i32, %arg1: i32) -> (i32, i32, i32) {
    %c0_i32 = arith.constant 0 : i32
    %c0_i32_0 = arith.constant 0 : i32
    return %arg0, %arg1, %c0_i32 : i32, i32, i32
  }
  func.func @transform_4(%arg0: i32, %arg1: i32) -> (i32, i32) {
    %c0_i32 = arith.constant 0 : i32
    %c0_i32_0 = arith.constant 0 : i32
    %c0_i32_1 = arith.constant 0 : i32
    return %c0_i32, %c0_i32_0 : i32, i32
  }
  func.func @transform_5(%arg0: i32, %arg1: i32) -> (i32, i32) {
    %c0_i32 = arith.constant 0 : i32
    %c0_i32_0 = arith.constant 0 : i32
    %c0_i32_1 = arith.constant 0 : i32
    return %c0_i32, %c0_i32_0 : i32, i32
  }
  func.func @transform_6(%arg0: i32, %arg1: i32) -> (i32, i32) {
    %c0_i32 = arith.constant 0 : i32
    %c0_i32_0 = arith.constant 0 : i32
    %c0_i32_1 = arith.constant 0 : i32
    return %c0_i32, %c0_i32_0 : i32, i32
  }
  func.func @transform_7(%arg0: i32, %arg1: i32) -> (i32, i32) {
    %c0_i32 = arith.constant 0 : i32
    %c0_i32_0 = arith.constant 0 : i32
    %c0_i32_1 = arith.constant 0 : i32
    return %c0_i32, %c0_i32_0 : i32, i32
  }
  func.func @transform_8(%arg0: i32, %arg1: i32) -> (i32, i32) {
    %c0_i32 = arith.constant 0 : i32
    %c0_i32_0 = arith.constant 0 : i32
    %c0_i32_1 = arith.constant 0 : i32
    return %c0_i32, %c0_i32_0 : i32, i32
  }
  func.func @transform_9(%arg0: i32, %arg1: i32) -> (i32, i32) {
    %c0_i32 = arith.constant 0 : i32
    %c0_i32_0 = arith.constant 0 : i32
    %c0_i32_1 = arith.constant 0 : i32
    return %c0_i32, %c0_i32_0 : i32, i32
  }
  func.func @transform_10(%arg0: i32, %arg1: i32) -> (i32, i32) {
    %c0_i32 = arith.constant 0 : i32
    %c0_i32_0 = arith.constant 0 : i32
    %c0_i32_1 = arith.constant 0 : i32
    return %c0_i32, %c0_i32_0 : i32, i32
  }
  func.func @transform_11(%arg0: i32, %arg1: i32) -> (i32, i32) {
    %c0_i32 = arith.constant 0 : i32
    %c0_i32_0 = arith.constant 0 : i32
    %c0_i32_1 = arith.constant 0 : i32
    return %c0_i32, %c0_i32_0 : i32, i32
  }
  func.func @transform_12(%arg0: i32, %arg1: i32) -> (i32, i32) {
    %c0_i32 = arith.constant 0 : i32
    %c0_i32_0 = arith.constant 0 : i32
    %c0_i32_1 = arith.constant 0 : i32
    return %c0_i32, %c0_i32_0 : i32, i32
  }
  func.func @transform_13(%arg0: i32, %arg1: i32) -> (i32, i32, i32, i32) {
    %c0_i32 = arith.constant 0 : i32
    %c0_i32_0 = arith.constant 0 : i32
    %c0_i32_1 = arith.constant 0 : i32
    return %arg0, %c0_i32, %arg1, %c0_i32_0 : i32, i32, i32, i32
  }
}

</mosaic_0001>

<llo_original>
// kernel: tpu_custom_call.1
$region0: #{tpu_custom_call.1}
  #allocation0 [shape = 'u32[]', space=smem, size = 0x4, offset = 0x4, fixed_abs, tag = 'smem constant byte address 0x4 - core index']
  #allocation1 [shape = 'u32[144,128]{1,0:T(1,128)}', space=vmem, size = 0x12000, scoped, tag = 'internal scratch']
  %s0 = inlined_call_operand.hbm [shape: f32[2,8,16], index: 0, kind: input, shape index: {}]
  %s1 = inlined_call_operand.hbm [shape: f32[2,8,8], index: 1, kind: input, shape index: {}]
  %s2 = inlined_call_operand.vmem [shape: f32[2,8,1], index: 2, kind: input, shape index: {}]
  %s3 = inlined_call_operand.vmem [shape: s32[2,8,1], index: 3, kind: input, shape index: {}]
  %s4 = inlined_call_operand.hbm [shape: f32[16,128], index: 4, kind: input, shape index: {}]
  %s5 = inlined_call_operand.vmem [shape: f32[1,128], index: 5, kind: input, shape index: {}]
  %s6 = inlined_call_operand.vmem [shape: f32[8,128], index: 6, kind: input, shape index: {}]
  %s7 = inlined_call_operand.hbm [shape: f32[1,128], index: 7, kind: input, shape index: {}]
  %s8 = inlined_call_operand.hbm [shape: f32[1,128], index: 8, kind: input, shape index: {}]
  %s9 = inlined_call_operand.hbm [shape: f32[1,128], index: 9, kind: input, shape index: {}]
  %s10 = inlined_call_operand.vmem [shape: f32[64,128], index: 10, kind: input, shape index: {}]
  %s11 = inlined_call_operand.vmem [shape: f32[1,128], index: 11, kind: input, shape index: {}]
  %s12 = inlined_call_operand.vmem [shape: f32[1,128], index: 12, kind: input, shape index: {}]
  %s13 = inlined_call_operand.hbm [shape: f32[2,3,8,128], index: 13, kind: output, shape index: {}]
  %s14 = sld [smem:[#allocation0]]
  $region109: #{tpu_custom_call.1} parent=0
    _
  %s16 = ssub.s32 1, %s14
  %s17 = scalar_select 0, %s16, %s14
  $region1: #{tpu_custom_call.1} parent=0
    #allocation2 [shape = 'u8[8192]{0}', space=vmem, size = 0x2000, scoped, tag = 'input window, operand 0']
    #allocation3 [shape = 's32[2]{0}', space=sflag, size = 0x8, scoped, tag = 'scoped memory for tpu_custom_call.1']
    #allocation4 [shape = 's32[2]{0}', space=sflag, size = 0x8, scoped, tag = 'scoped memory for tpu_custom_call.1']
    #allocation5 [shape = 'u8[8192]{0}', space=vmem, size = 0x2000, scoped, tag = 'input window, operand 1']
    #allocation6 [shape = 's32[2]{0}', space=sflag, size = 0x8, scoped, tag = 'scoped memory for tpu_custom_call.1']
    #allocation7 [shape = 'u8[8192]{0}', space=vmem, size = 0x2000, scoped, tag = 'input window, operand 4, single buffered']
    #allocation8 [shape = 'u8[512]{0}', space=vmem, size = 0x400, scoped, tag = 'input window, operand 7, single buffered']
    #allocation9 [shape = 's32[1]{0}', space=sflag, size = 0x4, scoped, tag = 'scoped memory for tpu_custom_call.1']
    #allocation10 [shape = 'u8[512]{0}', space=vmem, size = 0x400, scoped, tag = 'input window, operand 8, single buffered']
    #allocation11 [shape = 'u8[512]{0}', space=vmem, size = 0x400, scoped, tag = 'input window, operand 9, single buffered']
    #allocation12 [shape = 's32[1]{0}', space=sflag, size = 0x4, scoped, tag = 'scoped memory for tpu_custom_call.1']
    #allocation13 [shape = 'u8[24576]{0}', space=vmem, size = 0x6000, scoped, tag = 'output window, operand 0']
    %18 = vsyncpa [#allocation3], 0
    %s19 = scalar_lea.sflag [#allocation3], 1
    %20 = vsyncpa %s19, 0
    %21 = vsyncpa [#allocation6], 0
    %s22 = scalar_lea.sflag [#allocation6], 1
    %23 = vsyncpa %s22, 0
    %24 = vsyncpa [#allocation9], 0
    %25 = vsyncpa [#allocation12], 0
    %26 = vsyncpa [#allocation4], 0
    %s27 = scalar_lea.sflag [#allocation4], 1
    %28 = vsyncpa %s27, 0
    loop: start=0, step=1, limit=4
    $region2: #{tpu_custom_call.1} parent=1 // loop_pre_header
      _
    $region3: #{tpu_custom_call.1} parent=1 // loop_header
      %s30 = sphi 0, %s34
      %p31 = scmp.ge.s32.totalorder %s30, 4
      %s37 = sphi 0, %s49
      %s38 = sphi 0, %s45
      %s39 = sphi 0, %s37
      %s40 = sphi 0, %s38
      %s41 = sphi 0, %s39
      %s42 = sphi 0, %s40
      %s54 = sphi 0, %s56
      %s57 = sphi 0, %s54
      %s58 = sphi 0, %s57
      %s74 = sphi 0, %s58
      %s82 = sphi 0, %s84
      %s85 = sphi 0, %s82
      %s86 = sphi 0, %s85
      %s102 = sphi 0, %s86
      %s110 = sphi 0, %s112
      %s113 = sphi 0, %s110
      %s114 = sphi 0, %s113
      %s130 = sphi 0, %s114
      %s138 = sphi 0, %s140
      %s141 = sphi 0, %s138
      %s142 = sphi 0, %s141
      %s158 = sphi 0, %s142
      %s162 = sphi 0, %s162
      %s164 = sphi 0, %s162
      %s165 = sphi 0, %s164
      %s179 = sphi 0, %s165
      %s183 = sphi 0, %s183
      %s185 = sphi 0, %s183
      %s186 = sphi 0, %s185
      %s200 = sphi 0, %s186
      %s204 = sphi 0, %s204
      %s206 = sphi 0, %s204
      %s207 = sphi 0, %s206
      %s221 = sphi 0, %s207
      %s225 = sphi 0, %s225
      %s227 = sphi 0, %s225
      %s228 = sphi 0, %s227
      %s242 = sphi 0, %s228
      %s246 = sphi 0, %s246
      %s248 = sphi 0, %s246
      %s249 = sphi 0, %s248
      %s263 = sphi 0, %s249
      %s267 = sphi 0, %s267
      %s269 = sphi 0, %s267
      %s270 = sphi 0, %s269
      %s284 = sphi 0, %s270
      %s288 = sphi 0, %s288
      %s290 = sphi 0, %s288
      %s291 = sphi 0, %s290
      %s305 = sphi 0, %s291
      %s309 = sphi 0, %s309
      %s311 = sphi 0, %s309
      %s312 = sphi 0, %s311
      %s326 = sphi 0, %s312
      %s330 = sphi 0, %s330
      %s332 = sphi 0, %s330
      %s333 = sphi 0, %s332
      %s347 = sphi 0, %s333
      %s355 = sphi 0, %s357
      %s358 = sphi 0, %s355
      %s359 = sphi 0, %s358
      %s375 = sphi 0, %s359
    $region4: #{tpu_custom_call.1} parent=1 // loop_header_branch
      %33 = sbr.rel (%p31) target = $region8
    $region5: #{tpu_custom_call.1} parent=1 // loop_body
      %s35 = ssub.s32 %s30, 1
      %s36 = ssub.s32 %s30, 2
      %s43 = sadd.s32 1, %s38
      %p44 = scmp.ge.s32.totalorder %s43, 1
      %s45 = scalar_select %p44, 0, %s43
      %s46 = sadd.s32 1, %s37
      %s47 = scalar_select %p44, %s46, %s37
      %p48 = scmp.ge.s32.totalorder %s47, 2
      %s49 = scalar_select %p48, 0, %s47
      %s50 = ssub.s32 %s37, %s49
      %s51 = ssub.s32 %s38, %s45
      %s52 = sor.u32 %s50, %s51
      %p53 = scmp.eq.s32.totalorder %s52, 0
      %s55 = sadd.s32 %s54, 1
      %s56 = scalar_select %p53, %s54, %s55
      %p59 = pneg %p53
      %p60 = scmp.eq.s32.totalorder %s30, 1
      %p61 = por %p59, %p60
      %p62 = scmp.ne.s32.totalorder %s54, %s57
      %p63 = scmp.eq.s32.totalorder %s30, 0
      %p64 = por %p62, %p63
      %p65 = scmp.ne.s32.totalorder %s54, %s57
      %p66 = scmp.eq.s32.totalorder %s35, 1
      %p67 = por %p65, %p66
      %p68 = scmp.ne.s32.totalorder %s57, %s58
      %p69 = scmp.eq.s32.totalorder %s35, 0
      %p70 = por %p68, %p69
      %p71 = scmp.ne.s32.totalorder %s57, %s58
      %p72 = scmp.eq.s32.totalorder %s36, 1
      %p73 = por %p71, %p72
      %p75 = scmp.ne.s32.totalorder %s58, %s74
      %p76 = scmp.eq.s32.totalorder %s36, 0
      %p77 = por %p75, %p76
      %s78 = ssub.s32 %s37, %s49
      %s79 = ssub.s32 %s38, %s45
      %s80 = sor.u32 %s78, %s79
      %p81 = scmp.eq.s32.totalorder %s80, 0
      %s83 = sadd.s32 %s82, 1
      %s84 = scalar_select %p81, %s82, %s83
      %p87 = pneg %p81
      %p88 = scmp.eq.s32.totalorder %s30, 1
      %p89 = por %p87, %p88
      %p90 = scmp.ne.s32.totalorder %s82, %s85
      %p91 = scmp.eq.s32.totalorder %s30, 0
      %p92 = por %p90, %p91
      %p93 = scmp.ne.s32.totalorder %s82, %s85
      %p94 = scmp.eq.s32.totalorder %s35, 1
      %p95 = por %p93, %p94
      %p96 = scmp.ne.s32.totalorder %s85, %s86
      %p97 = scmp.eq.s32.totalorder %s35, 0
      %p98 = por %p96, %p97
      %p99 = scmp.ne.s32.totalorder %s85, %s86
      %p100 = scmp.eq.s32.totalorder %s36, 1
      %p101 = por %p99, %p100
      %p103 = scmp.ne.s32.totalorder %s86, %s102
      %p104 = scmp.eq.s32.totalorder %s36, 0
      %p105 = por %p103, %p104
      %s106 = ssub.s32 %s37, %s49
      %s107 = ssub.s32 %s38, %s45
      %s108 = sor.u32 %s106, %s107
      %p109 = scmp.eq.s32.totalorder %s108, 0
      %s111 = sadd.s32 %s110, 1
      %s112 = scalar_select %p109, %s110, %s111
      %p115 = pneg %p109
      %p116 = scmp.eq.s32.totalorder %s30, 1
      %p117 = por %p115, %p116
      %p118 = scmp.ne.s32.totalorder %s110, %s113
      %p119 = scmp.eq.s32.totalorder %s30, 0
      %p120 = por %p118, %p119
      %p121 = scmp.ne.s32.totalorder %s110, %s113
      %p122 = scmp.eq.s32.totalorder %s35, 1
      %p123 = por %p121, %p122
      %p124 = scmp.ne.s32.totalorder %s113, %s114
      %p125 = scmp.eq.s32.totalorder %s35, 0
      %p126 = por %p124, %p125
      %p127 = scmp.ne.s32.totalorder %s113, %s114
      %p128 = scmp.eq.s32.totalorder %s36, 1
      %p129 = por %p127, %p128
      %p131 = scmp.ne.s32.totalorder %s114, %s130
      %p132 = scmp.eq.s32.totalorder %s36, 0
      %p133 = por %p131, %p132
      %s134 = ssub.s32 %s37, %s49
      %s135 = ssub.s32 %s38, %s45
      %s136 = sor.u32 %s134, %s135
      %p137 = scmp.eq.s32.totalorder %s136, 0
      %s139 = sadd.s32 %s138, 1
      %s140 = scalar_select %p137, %s138, %s139
      %p143 = pneg %p137
      %p144 = scmp.eq.s32.totalorder %s30, 1
      %p145 = por %p143, %p144
      %p146 = scmp.ne.s32.totalorder %s138, %s141
      %p147 = scmp.eq.s32.totalorder %s30, 0
      %p148 = por %p146, %p147
      %p149 = scmp.ne.s32.totalorder %s138, %s141
      %p150 = scmp.eq.s32.totalorder %s35, 1
      %p151 = por %p149, %p150
      %p152 = scmp.ne.s32.totalorder %s141, %s142
      %p153 = scmp.eq.s32.totalorder %s35, 0
      %p154 = por %p152, %p153
      %p155 = scmp.ne.s32.totalorder %s141, %s142
      %p156 = scmp.eq.s32.totalorder %s36, 1
      %p157 = por %p155, %p156
      %p159 = scmp.ne.s32.totalorder %s142, %s158
      %p160 = scmp.eq.s32.totalorder %s36, 0
      %p161 = por %p159, %p160
      %s163 = sadd.s32 %s162, 1
      %p166 = scmp.eq.s32.totalorder %s30, 1
      %p167 = scmp.ne.s32.totalorder %s162, %s164
      %p168 = scmp.eq.s32.totalorder %s30, 0
      %p169 = por %p167, %p168
      %p170 = scmp.ne.s32.totalorder %s162, %s164
      %p171 = scmp.eq.s32.totalorder %s35, 1
      %p172 = por %p170, %p171
      %p173 = scmp.ne.s32.totalorder %s164, %s165
      %p174 = scmp.eq.s32.totalorder %s35, 0
      %p175 = por %p173, %p174
      %p176 = scmp.ne.s32.totalorder %s164, %s165
      %p177 = scmp.eq.s32.totalorder %s36, 1
      %p178 = por %p176, %p177
      %p180 = scmp.ne.s32.totalorder %s165, %s179
      %p181 = scmp.eq.s32.totalorder %s36, 0
      %p182 = por %p180, %p181
      %s184 = sadd.s32 %s183, 1
      %p187 = scmp.eq.s32.totalorder %s30, 1
      %p188 = scmp.ne.s32.totalorder %s183, %s185
      %p189 = scmp.eq.s32.totalorder %s30, 0
      %p190 = por %p188, %p189
      %p191 = scmp.ne.s32.totalorder %s183, %s185
      %p192 = scmp.eq.s32.totalorder %s35, 1
      %p193 = por %p191, %p192
      %p194 = scmp.ne.s32.totalorder %s185, %s186
      %p195 = scmp.eq.s32.totalorder %s35, 0
      %p196 = por %p194, %p195
      %p197 = scmp.ne.s32.totalorder %s185, %s186
      %p198 = scmp.eq.s32.totalorder %s36, 1
      %p199 = por %p197, %p198
      %p201 = scmp.ne.s32.totalorder %s186, %s200
      %p202 = scmp.eq.s32.totalorder %s36, 0
      %p203 = por %p201, %p202
      %s205 = sadd.s32 %s204, 1
      %p208 = scmp.eq.s32.totalorder %s30, 1
      %p209 = scmp.ne.s32.totalorder %s204, %s206
      %p210 = scmp.eq.s32.totalorder %s30, 0
      %p211 = por %p209, %p210
      %p212 = scmp.ne.s32.totalorder %s204, %s206
      %p213 = scmp.eq.s32.totalorder %s35, 1
      %p214 = por %p212, %p213
      %p215 = scmp.ne.s32.totalorder %s206, %s207
      %p216 = scmp.eq.s32.totalorder %s35, 0
      %p217 = por %p215, %p216
      %p218 = scmp.ne.s32.totalorder %s206, %s207
      %p219 = scmp.eq.s32.totalorder %s36, 1
      %p220 = por %p218, %p219
      %p222 = scmp.ne.s32.totalorder %s207, %s221
      %p223 = scmp.eq.s32.totalorder %s36, 0
      %p224 = por %p222, %p223
      %s226 = sadd.s32 %s225, 1
      %p229 = scmp.eq.s32.totalorder %s30, 1
      %p230 = scmp.ne.s32.totalorder %s225, %s227
      %p231 = scmp.eq.s32.totalorder %s30, 0
      %p232 = por %p230, %p231
      %p233 = scmp.ne.s32.totalorder %s225, %s227
      %p234 = scmp.eq.s32.totalorder %s35, 1
      %p235 = por %p233, %p234
      %p236 = scmp.ne.s32.totalorder %s227, %s228
      %p237 = scmp.eq.s32.totalorder %s35, 0
      %p238 = por %p236, %p237
      %p239 = scmp.ne.s32.totalorder %s227, %s228
      %p240 = scmp.eq.s32.totalorder %s36, 1
      %p241 = por %p239, %p240
      %p243 = scmp.ne.s32.totalorder %s228, %s242
      %p244 = scmp.eq.s32.totalorder %s36, 0
      %p245 = por %p243, %p244
      %s247 = sadd.s32 %s246, 1
      %p250 = scmp.eq.s32.totalorder %s30, 1
      %p251 = scmp.ne.s32.totalorder %s246, %s248
      %p252 = scmp.eq.s32.totalorder %s30, 0
      %p253 = por %p251, %p252
      %p254 = scmp.ne.s32.totalorder %s246, %s248
      %p255 = scmp.eq.s32.totalorder %s35, 1
      %p256 = por %p254, %p255
      %p257 = scmp.ne.s32.totalorder %s248, %s249
      %p258 = scmp.eq.s32.totalorder %s35, 0
      %p259 = por %p257, %p258
      %p260 = scmp.ne.s32.totalorder %s248, %s249
      %p261 = scmp.eq.s32.totalorder %s36, 1
      %p262 = por %p260, %p261
      %p264 = scmp.ne.s32.totalorder %s249, %s263
      %p265 = scmp.eq.s32.totalorder %s36, 0
      %p266 = por %p264, %p265
      %s268 = sadd.s32 %s267, 1
      %p271 = scmp.eq.s32.totalorder %s30, 1
      %p272 = scmp.ne.s32.totalorder %s267, %s269
      %p273 = scmp.eq.s32.totalorder %s30, 0
      %p274 = por %p272, %p273
      %p275 = scmp.ne.s32.totalorder %s267, %s269
      %p276 = scmp.eq.s32.totalorder %s35, 1
      %p277 = por %p275, %p276
      %p278 = scmp.ne.s32.totalorder %s269, %s270
      %p279 = scmp.eq.s32.totalorder %s35, 0
      %p280 = por %p278, %p279
      %p281 = scmp.ne.s32.totalorder %s269, %s270
      %p282 = scmp.eq.s32.totalorder %s36, 1
      %p283 = por %p281, %p282
      %p285 = scmp.ne.s32.totalorder %s270, %s284
      %p286 = scmp.eq.s32.totalorder %s36, 0
      %p287 = por %p285, %p286
      %s289 = sadd.s32 %s288, 1
      %p292 = scmp.eq.s32.totalorder %s30, 1
      %p293 = scmp.ne.s32.totalorder %s288, %s290
      %p294 = scmp.eq.s32.totalorder %s30, 0
      %p295 = por %p293, %p294
      %p296 = scmp.ne.s32.totalorder %s288, %s290
      %p297 = scmp.eq.s32.totalorder %s35, 1
      %p298 = por %p296, %p297
      %p299 = scmp.ne.s32.totalorder %s290, %s291
      %p300 = scmp.eq.s32.totalorder %s35, 0
      %p301 = por %p299, %p300
      %p302 = scmp.ne.s32.totalorder %s290, %s291
      %p303 = scmp.eq.s32.totalorder %s36, 1
      %p304 = por %p302, %p303
      %p306 = scmp.ne.s32.totalorder %s291, %s305
      %p307 = scmp.eq.s32.totalorder %s36, 0
      %p308 = por %p306, %p307
      %s310 = sadd.s32 %s309, 1
      %p313 = scmp.eq.s32.totalorder %s30, 1
      %p314 = scmp.ne.s32.totalorder %s309, %s311
      %p315 = scmp.eq.s32.totalorder %s30, 0
      %p316 = por %p314, %p315
      %p317 = scmp.ne.s32.totalorder %s309, %s311
      %p318 = scmp.eq.s32.totalorder %s35, 1
      %p319 = por %p317, %p318
      %p320 = scmp.ne.s32.totalorder %s311, %s312
      %p321 = scmp.eq.s32.totalorder %s35, 0
      %p322 = por %p320, %p321
      %p323 = scmp.ne.s32.totalorder %s311, %s312
      %p324 = scmp.eq.s32.totalorder %s36, 1
      %p325 = por %p323, %p324
      %p327 = scmp.ne.s32.totalorder %s312, %s326
      %p328 = scmp.eq.s32.totalorder %s36, 0
      %p329 = por %p327, %p328
      %s331 = sadd.s32 %s330, 1
      %p334 = scmp.eq.s32.totalorder %s30, 1
      %p335 = scmp.ne.s32.totalorder %s330, %s332
      %p336 = scmp.eq.s32.totalorder %s30, 0
      %p337 = por %p335, %p336
      %p338 = scmp.ne.s32.totalorder %s330, %s332
      %p339 = scmp.eq.s32.totalorder %s35, 1
      %p340 = por %p338, %p339
      %p341 = scmp.ne.s32.totalorder %s332, %s333
      %p342 = scmp.eq.s32.totalorder %s35, 0
      %p343 = por %p341, %p342
      %p344 = scmp.ne.s32.totalorder %s332, %s333
      %p345 = scmp.eq.s32.totalorder %s36, 1
      %p346 = por %p344, %p345
      %p348 = scmp.ne.s32.totalorder %s333, %s347
      %p349 = scmp.eq.s32.totalorder %s36, 0
      %p350 = por %p348, %p349
      %s351 = ssub.s32 %s37, %s49
      %s352 = ssub.s32 %s38, %s45
      %s353 = sor.u32 %s351, %s352
      %p354 = scmp.eq.s32.totalorder %s353, 0
      %s356 = sadd.s32 %s355, 1
      %s357 = scalar_select %p354, %s355, %s356
      %p360 = pneg %p354
      %p361 = scmp.eq.s32.totalorder %s30, 1
      %p362 = por %p360, %p361
      %p363 = scmp.ne.s32.totalorder %s355, %s358
      %p364 = scmp.eq.s32.totalorder %s30, 0
      %p365 = por %p363, %p364
      %p366 = scmp.ne.s32.totalorder %s355, %s358
      %p367 = scmp.eq.s32.totalorder %s35, 1
      %p368 = por %p366, %p367
      %p369 = scmp.ne.s32.totalorder %s358, %s359
      %p370 = scmp.eq.s32.totalorder %s35, 0
      %p371 = por %p369, %p370
      %p372 = scmp.ne.s32.totalorder %s358, %s359
      %p373 = scmp.eq.s32.totalorder %s36, 1
      %p374 = por %p372, %p373
      %p376 = scmp.ne.s32.totalorder %s359, %s375
      %p377 = scmp.eq.s32.totalorder %s36, 0
      %p378 = por %p376, %p377
      %p379 = scmp.le.s32.totalorder 1, %s30
      %p380 = scmp.lt.s32.totalorder %s30, 3
      %p381 = pnand %p379, %p380
      %p382 = pneg %p381
      // Predicated region
      $region9: #{tpu_custom_call.1} parent=5 // pred_check
        _
      $region10: #{tpu_custom_call.1} parent=5 // pred_check_branch
        %384 = sbr.rel (%p381) target = $region12
      $region11: #{tpu_custom_call.1} parent=5 // pred_region
        %s385 = ssub.s32 %s30, 1
        // Predicated region
        $region13: #{tpu_custom_call.1} parent=11 // pred_check
          %p386 = pneg %p175
        $region14: #{tpu_custom_call.1} parent=11 // pred_check_branch
          %388 = sbr.rel (%p386) target = $region16
        $region15: #{tpu_custom_call.1} parent=11 // pred_region
          %s390 = ssub.s32 256, 256
          %391 = vsyncadd [#allocation6], %s390
          %s392 = sshll.u32 [#allocation7], 4
          %s393 = int_to_ptr.vmem [resolvable:$true] %s392
          %398 = dma.hbm_to_vmem [thread:$0]  %s4, 256, %s393, [#allocation6], 128, 128, 8
        $region16: #{tpu_custom_call.1} parent=11 // pred_fallthru
          _
        // Predicated region
        $region17: #{tpu_custom_call.1} parent=11 // pred_check
          %p399 = pneg %p196
        $region18: #{tpu_custom_call.1} parent=11 // pred_check_branch
          %401 = sbr.rel (%p399) target = $region20
        $region19: #{tpu_custom_call.1} parent=11 // pred_region
          _
        $region20: #{tpu_custom_call.1} parent=11 // pred_fallthru
          _
        // Predicated region
        $region21: #{tpu_custom_call.1} parent=11 // pred_check
          %p402 = pneg %p217
        $region22: #{tpu_custom_call.1} parent=11 // pred_check_branch
          %404 = sbr.rel (%p402) target = $region24
        $region23: #{tpu_custom_call.1} parent=11 // pred_region
          _
        $region24: #{tpu_custom_call.1} parent=11 // pred_fallthru
          _
        // Predicated region
        $region25: #{tpu_custom_call.1} parent=11 // pred_check
          %p405 = pneg %p238
        $region26: #{tpu_custom_call.1} parent=11 // pred_check_branch
          %407 = sbr.rel (%p405) target = $region28
        $region27: #{tpu_custom_call.1} parent=11 // pred_region
          %s409 = ssub.s32 16, 16
          %410 = vsyncadd [#allocation9], %s409
          %s412 = sshll.u32 [#allocation8], 4
          %s413 = int_to_ptr.vmem [resolvable:$true] %s412
          %415 = dma.hbm_to_vmem [thread:$0]  %s7, 16, %s413, [#allocation9]
        $region28: #{tpu_custom_call.1} parent=11 // pred_fallthru
          _
        // Predicated region
        $region29: #{tpu_custom_call.1} parent=11 // pred_check
          %p416 = pneg %p259
        $region30: #{tpu_custom_call.1} parent=11 // pred_check_branch
          %418 = sbr.rel (%p416) target = $region32
        $region31: #{tpu_custom_call.1} parent=11 // pred_region
          %s420 = ssub.s32 16, 16
          %421 = vsyncadd [#allocation9], %s420
          %s423 = sshll.u32 [#allocation10], 4
          %s424 = int_to_ptr.vmem [resolvable:$true] %s423
          %426 = dma.hbm_to_vmem [thread:$0]  %s8, 16, %s424, [#allocation9]
        $region32: #{tpu_custom_call.1} parent=11 // pred_fallthru
          _
        // Predicated region
        $region33: #{tpu_custom_call.1} parent=11 // pred_check
          %p427 = pneg %p280
        $region34: #{tpu_custom_call.1} parent=11 // pred_check_branch
          %429 = sbr.rel (%p427) target = $region36
        $region35: #{tpu_custom_call.1} parent=11 // pred_region
          %s431 = ssub.s32 16, 16
          %432 = vsyncadd [#allocation12], %s431
          %s434 = sshll.u32 [#allocation11], 4
          %s435 = int_to_ptr.vmem [resolvable:$true] %s434
          %437 = dma.hbm_to_vmem [thread:$0]  %s9, 16, %s435, [#allocation12]
        $region36: #{tpu_custom_call.1} parent=11 // pred_fallthru
          _
        // Predicated region
        $region37: #{tpu_custom_call.1} parent=11 // pred_check
          %p438 = pneg %p301
        $region38: #{tpu_custom_call.1} parent=11 // pred_check_branch
          %440 = sbr.rel (%p438) target = $region40
        $region39: #{tpu_custom_call.1} parent=11 // pred_region
          _
        $region40: #{tpu_custom_call.1} parent=11 // pred_fallthru
          _
        // Predicated region
        $region41: #{tpu_custom_call.1} parent=11 // pred_check
          %p441 = pneg %p322
        $region42: #{tpu_custom_call.1} parent=11 // pred_check_branch
          %443 = sbr.rel (%p441) target = $region44
        $region43: #{tpu_custom_call.1} parent=11 // pred_region
          _
        $region44: #{tpu_custom_call.1} parent=11 // pred_fallthru
          _
        // Predicated region
        $region45: #{tpu_custom_call.1} parent=11 // pred_check
          %p444 = pneg %p343
        $region46: #{tpu_custom_call.1} parent=11 // pred_check_branch
          %446 = sbr.rel (%p444) target = $region48
        $region47: #{tpu_custom_call.1} parent=11 // pred_region
          _
        $region48: #{tpu_custom_call.1} parent=11 // pred_fallthru
          _
      $region12: #{tpu_custom_call.1} parent=5 // pred_fallthru
        _
      %p447 = scmp.lt.s32.totalorder %s30, 2
      // Predicated region
      $region49: #{tpu_custom_call.1} parent=5 // pred_check
        %p448 = pneg %p447
      $region50: #{tpu_custom_call.1} parent=5 // pred_check_branch
        %450 = sbr.rel (%p448) target = $region52
      $region51: #{tpu_custom_call.1} parent=5 // pred_region
        // Predicated region
        $region53: #{tpu_custom_call.1} parent=51 // pred_check
          %p451 = pneg %p64
        $region54: #{tpu_custom_call.1} parent=51 // pred_check_branch
          %453 = sbr.rel (%p451) target = $region56
        $region55: #{tpu_custom_call.1} parent=51 // pred_region
          %s454 = sand.u32 %s54, 1
          %s455 = scalar_lea.sflag [#allocation3], %s454
          %s456 = sand.u32 %s54, 1
          %s457 = smul.addr %s456, 8
          %s458 = scalar_lea.vmem [#allocation2], %s457
          %s460 = ssub.s32 128, 128
          %461 = vsyncadd %s455, %s460
          %s462 = sadd.s32 %s38, %s37
          %s463 = smul.addr %s462, 128
          %s464 = scalar_lea.hbm %s0, %s463
          %s466 = sshll.u32 %s458, 4
          %s467 = int_to_ptr.vmem [resolvable:$true] %s466
          %469 = dma.hbm_to_vmem [thread:$0]  %s464, 128, %s467, %s455
        $region56: #{tpu_custom_call.1} parent=51 // pred_fallthru
          _
        // Predicated region
        $region57: #{tpu_custom_call.1} parent=51 // pred_check
          %p470 = pneg %p92
        $region58: #{tpu_custom_call.1} parent=51 // pred_check_branch
          %472 = sbr.rel (%p470) target = $region60
        $region59: #{tpu_custom_call.1} parent=51 // pred_region
          %s473 = sand.u32 %s30, 1
          %s474 = scalar_lea.sflag [#allocation6], %s473
          %s475 = sand.u32 %s82, 1
          %s476 = smul.addr %s475, 8
          %s477 = scalar_lea.vmem [#allocation5], %s476
          %s479 = ssub.s32 128, 128
          %480 = vsyncadd %s474, %s479
          %s481 = sadd.s32 %s38, %s37
          %s482 = smul.addr %s481, 128
          %s483 = scalar_lea.hbm %s1, %s482
          %s485 = sshll.u32 %s477, 4
          %s486 = int_to_ptr.vmem [resolvable:$true] %s485
          %488 = dma.hbm_to_vmem [thread:$0]  %s483, 128, %s486, %s474
        $region60: #{tpu_custom_call.1} parent=51 // pred_fallthru
          _
        // Predicated region
        $region61: #{tpu_custom_call.1} parent=51 // pred_check
          %p489 = pneg %p120
        $region62: #{tpu_custom_call.1} parent=51 // pred_check_branch
          %491 = sbr.rel (%p489) target = $region64
        $region63: #{tpu_custom_call.1} parent=51 // pred_region
          %p492 = scmp.lt.s32.totalorder %s37, 1
          %s493 = scalar_select %p492, %s37, 1
          %p494 = scmp.lt.s32.totalorder %s38, 0
          %s495 = scalar_select %p494, %s38, 0
          %s496 = sadd.s32 %s495, %s493
          %s497 = smul.addr %s496, 8
          %s498 = scalar_lea.vmem %s2, %s497
        $region64: #{tpu_custom_call.1} parent=51 // pred_fallthru
          _
        // Predicated region
        $region65: #{tpu_custom_call.1} parent=51 // pred_check
          %p499 = pneg %p148
        $region66: #{tpu_custom_call.1} parent=51 // pred_check_branch
          %501 = sbr.rel (%p499) target = $region68
        $region67: #{tpu_custom_call.1} parent=51 // pred_region
          %p502 = scmp.lt.s32.totalorder %s37, 1
          %s503 = scalar_select %p502, %s37, 1
          %p504 = scmp.lt.s32.totalorder %s38, 0
          %s505 = scalar_select %p504, %s38, 0
          %s506 = sadd.s32 %s505, %s503
          %s507 = smul.addr %s506, 8
          %s508 = scalar_lea.vmem %s3, %s507
        $region68: #{tpu_custom_call.1} parent=51 // pred_fallthru
          _
      $region52: #{tpu_custom_call.1} parent=5 // pred_fallthru
        _
      %p509 = scmp.le.s32.totalorder 1, %s30
      %p510 = scmp.lt.s32.totalorder %s30, 3
      %p511 = pnand %p509, %p510
      %p512 = pneg %p511
      // Predicated region
      $region69: #{tpu_custom_call.1} parent=5 // pred_check
        _
      $region70: #{tpu_custom_call.1} parent=5 // pred_check_branch
        %514 = sbr.rel (%p511) target = $region72
      $region71: #{tpu_custom_call.1} parent=5 // pred_region
        %s515 = ssub.s32 %s30, 1
        %s516 = sand.u32 %s57, 1
        %s517 = scalar_lea.sflag [#allocation3], %s516
        %s518 = sand.u32 %s57, 1
        %s519 = smul.addr %s518, 8
        %s520 = scalar_lea.vmem [#allocation2], %s519
        // Predicated region
        $region73: #{tpu_custom_call.1} parent=71 // pred_check
          %p521 = pneg %p70
        $region74: #{tpu_custom_call.1} parent=71 // pred_check_branch
          %523 = sbr.rel (%p521) target = $region76
        $region75: #{tpu_custom_call.1} parent=71 // pred_region
          %524 = dma.done %s517, 128
        $region76: #{tpu_custom_call.1} parent=71 // pred_fallthru
          _
        %s525 = sand.u32 %s35, 1
        %s526 = scalar_lea.sflag [#allocation6], %s525
        %s527 = sand.u32 %s85, 1
        %s528 = smul.addr %s527, 8
        %s529 = scalar_lea.vmem [#allocation5], %s528
        // Predicated region
        $region77: #{tpu_custom_call.1} parent=71 // pred_check
          %p530 = pneg %p98
        $region78: #{tpu_custom_call.1} parent=71 // pred_check_branch
          %532 = sbr.rel (%p530) target = $region80
        $region79: #{tpu_custom_call.1} parent=71 // pred_region
          %533 = dma.done %s526, 128
        $region80: #{tpu_custom_call.1} parent=71 // pred_fallthru
          _
        // Predicated region
        $region81: #{tpu_custom_call.1} parent=71 // pred_check
          %p534 = pneg %p175
        $region82: #{tpu_custom_call.1} parent=71 // pred_check_branch
          %536 = sbr.rel (%p534) target = $region84
        $region83: #{tpu_custom_call.1} parent=71 // pred_region
          %537 = dma.done [#allocation6], 256
        $region84: #{tpu_custom_call.1} parent=71 // pred_fallthru
          _
        // Predicated region
        $region85: #{tpu_custom_call.1} parent=71 // pred_check
          %p538 = pneg %p238
        $region86: #{tpu_custom_call.1} parent=71 // pred_check_branch
          %540 = sbr.rel (%p538) target = $region88
        $region87: #{tpu_custom_call.1} parent=71 // pred_region
          %541 = dma.done [#allocation9], 16
        $region88: #{tpu_custom_call.1} parent=71 // pred_fallthru
          _
        // Predicated region
        $region89: #{tpu_custom_call.1} parent=71 // pred_check
          %p542 = pneg %p259
        $region90: #{tpu_custom_call.1} parent=71 // pred_check_branch
          %544 = sbr.rel (%p542) target = $region92
        $region91: #{tpu_custom_call.1} parent=71 // pred_region
          %545 = dma.done [#allocation9], 16
        $region92: #{tpu_custom_call.1} parent=71 // pred_fallthru
          _
        // Predicated region
        $region93: #{tpu_custom_call.1} parent=71 // pred_check
          %p546 = pneg %p280
        $region94: #{tpu_custom_call.1} parent=71 // pred_check_branch
          %548 = sbr.rel (%p546) target = $region96
        $region95: #{tpu_custom_call.1} parent=71 // pred_region
          %549 = dma.done [#allocation12], 16
        $region96: #{tpu_custom_call.1} parent=71 // pred_fallthru
          _
        %s550 = sand.u32 %s57, 1
        %s551 = scalar_lea.sflag [#allocation3], %s550
        %s552 = sand.u32 %s57, 1
        %s553 = smul.addr %s552, 8
        %s554 = scalar_lea.vmem [#allocation2], %s553
        %p555 = pneg %p70
        %p556 = pneg %p67
        %s557 = sand.u32 %s35, 1
        %s558 = scalar_lea.sflag [#allocation6], %s557
        %s559 = sand.u32 %s85, 1
        %s560 = smul.addr %s559, 8
        %s561 = scalar_lea.vmem [#allocation5], %s560
        %p562 = pneg %p98
        %p563 = pneg %p95
        %p564 = scmp.lt.s32.totalorder %s39, 1
        %s565 = scalar_select %p564, %s39, 1
        %p566 = scmp.lt.s32.totalorder %s40, 0
        %s567 = scalar_select %p566, %s40, 0
        %s568 = sadd.s32 %s567, %s565
        %s569 = smul.addr %s568, 8
        %s570 = scalar_lea.vmem %s2, %s569
        %p571 = pneg %p126
        %p572 = pneg %p123
        %p573 = scmp.lt.s32.totalorder %s39, 1
        %s574 = scalar_select %p573, %s39, 1
        %p575 = scmp.lt.s32.totalorder %s40, 0
        %s576 = scalar_select %p575, %s40, 0
        %s577 = sadd.s32 %s576, %s574
        %s578 = smul.addr %s577, 8
        %s579 = scalar_lea.vmem %s3, %s578
        %p580 = pneg %p154
        %p581 = pneg %p151
        %p582 = pneg %p175
        %p583 = pneg %p172
        %p584 = pneg %p196
        %p585 = pneg %p193
        %p586 = pneg %p217
        %p587 = pneg %p214
        %p588 = pneg %p238
        %p589 = pneg %p235
        %p590 = pneg %p259
        %p591 = pneg %p256
        %p592 = pneg %p280
        %p593 = pneg %p277
        %p594 = pneg %p301
        %p595 = pneg %p298
        %p596 = pneg %p322
        %p597 = pneg %p319
        %p598 = pneg %p343
        %p599 = pneg %p340
        %p600 = pneg %p371
        %p601 = pneg %p368
        %s602 = sand.u32 %s358, 1
        %s603 = scalar_lea.sflag [#allocation4], %s602
        %s604 = sand.u32 %s358, 1
        %s605 = smul.addr %s604, 24
        %s606 = scalar_lea.vmem [#allocation13], %s605
        %p607 = scmp.lt.s32.totalorder %s39, 1
        %s608 = scalar_select %p607, %s39, 1
        %p609 = scmp.lt.s32.totalorder %s40, 0
        %s610 = scalar_select %p609, %s40, 0
        %s611 = sadd.s32 %s610, %s608
        %s612 = smul.addr %s611, 8
        %s613 = scalar_lea.vmem %s2, %s612
        %p614 = scmp.lt.s32.totalorder %s39, 1
        %s615 = scalar_select %p614, %s39, 1
        %p616 = scmp.lt.s32.totalorder %s40, 0
        %s617 = scalar_select %p616, %s40, 0
        %s618 = sadd.s32 %s617, %s615
        %s619 = smul.addr %s618, 8
        %s620 = scalar_lea.vmem %s3, %s619
        %v621 = vld [vmem:[%s620] sm:$0xff]
        %v622 = vlaneseq
        %v623 = vand.u32 %v622, 127
        %624 = vset.pattern.permute.xlu0 0
        %625 = vperm.xlu0 %624, %v621
        %v626 = vpop.permute.xlu0 %625
        %vm627 = vcmp.eq.s32.totalorder %v626, %v623
        %v628 = vsel %vm627, 1, 0
        %v629 = vcvt.s32.f32 %v628
        %v630 = vld [vmem:[%s10] sm:$0xff]
        %v631 = vld [vmem:[%s10 + $0x8] sm:$0xff]
        %v632 = vld [vmem:[%s10 + $0x10] sm:$0xff]
        %v633 = vld [vmem:[%s10 + $0x18] sm:$0xff]
        %v634 = vld [vmem:[%s10 + $0x20] sm:$0xff]
        %v635 = vld [vmem:[%s10 + $0x28] sm:$0xff]
        %v636 = vld [vmem:[%s10 + $0x30] sm:$0xff]
        %v637 = vld [vmem:[%s10 + $0x38] sm:$0xff]
        %vm638 = vcmask 523264
        %v640 = vsel %vm638, %v629, 0
        %642 = vmatprep.subr.mxu0 0.0
        %643 = vmatpush1.msra.mxu0 %v630
        %644 = vmatprep.subr.mxu0 0.0
        %645 = vmatpush1.msra.mxu0 %v631
        %646 = vmatprep.subr.mxu0 0.0
        %647 = vmatpush1.msra.mxu0 %v632
        %648 = vmatprep.subr.mxu0 0.0
        %649 = vmatpush1.msra.mxu0 %v633
        %650 = vmatprep.subr.mxu0 0.0
        %651 = vmatpush1.msra.mxu0 %v634
        %652 = vmatprep.subr.mxu0 0.0
        %653 = vmatpush1.msra.mxu0 %v635
        %654 = vmatprep.subr.mxu0 0.0
        %655 = vmatpush1.msra.mxu0 %v636
        %656 = vmatprep.subr.mxu0 0.0
        %657 = vmatpush1.msra.mxu0 %v637
        %658 = vmatprep.subr.mxu0 0.0
        %659 = vmatpush1.msra.mxu0 0.0
        %660 = vmatprep.subr.mxu0 0.0
        %661 = vmatpush1.msra.mxu0 0.0
        %662 = vmatprep.subr.mxu0 0.0
        %663 = vmatpush1.msra.mxu0 0.0
        %664 = vmatprep.subr.mxu0 0.0
        %665 = vmatpush1.msra.mxu0 0.0
        %666 = vmatprep.subr.mxu0 0.0
        %667 = vmatpush1.msra.mxu0 0.0
        %668 = vmatprep.subr.mxu0 0.0
        %669 = vmatpush1.msra.mxu0 0.0
        %670 = vmatprep.subr.mxu0 0.0
        %671 = vmatpush1.msra.mxu0 0.0
        %672 = vmatprep.subr.mxu0 0.0
        %673 = vmatpush1.msra.mxu0 0.0
        %674 = vmatprep.subr.mxu0 0.0
        %675 = vmatpush1.msra.mxu0 0.0
        %676 = vmatprep.subr.mxu0 0.0
        %677 = vmatpush1.msra.mxu0 0.0
        %678 = vmatprep.subr.mxu0 0.0
        %679 = vmatpush1.msra.mxu0 0.0
        %680 = vmatprep.subr.mxu0 0.0
        %681 = vmatpush1.msra.mxu0 0.0
        %682 = vmatprep.subr.mxu0 0.0
        %683 = vmatpush1.msra.mxu0 0.0
        %684 = vmatprep.subr.mxu0 0.0
        %685 = vmatpush1.msra.mxu0 0.0
        %686 = vmatprep.subr.mxu0 0.0
        %687 = vmatpush1.msra.mxu0 0.0
        %688 = vmatprep.subr.mxu0 0.0
        %689 = vmatpush1.msra.mxu0 0.0
        %690 = vmatprep.subr.mxu0 0.0
        %691 = vmatpush1.msra.mxu0 0.0
        %692 = vmatprep.subr.mxu0 0.0
        %693 = vmatpush1.msra.mxu0 0.0
        %694 = vmatprep.subr.mxu0 0.0
        %695 = vmatpush1.msra.mxu0 0.0
        %696 = vmatprep.subr.mxu0 0.0
        %697 = vmatpush1.msra.mxu0 0.0
        %698 = vmatprep.subr.mxu0 0.0
        %699 = vmatpush1.msra.mxu0 0.0
        %700 = vmatprep.subr.mxu0 0.0
        %701 = vmatpush1.msra.mxu0 0.0
        %702 = vmatprep.subr.mxu0 0.0
        %703 = vmatpush1.msra.mxu0 0.0
        %704 = vmatprep.subr.mxu0 0.0
        %705 = vmatpush1.msra.mxu0 0.0
        %706 = vmatprep.mubr.f32.mxu0 0.0
        %707 = vmatmul.mubr.f32.gmra.mrb[0].mxu0 %v640
        %v708 = vpop.f32.mrb[0].mxu0
        %v709 = vadd.f32 0.0, %v708
        %v710 = vpop.f32.mrb[0].mxu0
        %711 = vdwg.mxu0
        %v712 = vld [vmem:[%s520] sm:$0xff]
        %v713 = vld [vmem:[#allocation7] sm:$0xff]
        %v714 = vld [vmem:[#allocation7 + $0x8] sm:$0xff]
        %v715 = vld [vmem:[%s5] sm:$0x1]
        %v717 = vlaneseq
        %v718 = vshrl.u32 %v717, 7
        %v719 = vsub.s32 0, %v718
        %v720 = vrot.slane %v715, %v719
        %v722 = vadd.f32 %v720, %v709
        %vm723 = vcmask 130048
        %v725 = vsel %vm723, %v712, 0
        %727 = vmatprep.subr.mxu0 0.0
        %728 = vmatpush1.msra.mxu0 %v713
        %729 = vmatprep.subr.mxu0 0.0
        %730 = vmatpush1.msra.mxu0 %v714
        %731 = vmatprep.subr.mxu0 0.0
        %732 = vmatpush1.msra.mxu0 0.0
        %733 = vmatprep.subr.mxu0 0.0
        %734 = vmatpush1.msra.mxu0 0.0
        %735 = vmatprep.subr.mxu0 0.0
        %736 = vmatpush1.msra.mxu0 0.0
        %737 = vmatprep.subr.mxu0 0.0
        %738 = vmatpush1.msra.mxu0 0.0
        %739 = vmatprep.subr.mxu0 0.0
        %740 = vmatpush1.msra.mxu0 0.0
        %741 = vmatprep.subr.mxu0 0.0
        %742 = vmatpush1.msra.mxu0 0.0
        %743 = vmatprep.subr.mxu0 0.0
        %744 = vmatpush1.msra.mxu0 0.0
        %745 = vmatprep.subr.mxu0 0.0
        %746 = vmatpush1.msra.mxu0 0.0
        %747 = vmatprep.subr.mxu0 0.0
        %748 = vmatpush1.msra.mxu0 0.0
        %749 = vmatprep.subr.mxu0 0.0
        %750 = vmatpush1.msra.mxu0 0.0
        %751 = vmatprep.subr.mxu0 0.0
        %752 = vmatpush1.msra.mxu0 0.0
        %753 = vmatprep.subr.mxu0 0.0
        %754 = vmatpush1.msra.mxu0 0.0
        %755 = vmatprep.subr.mxu0 0.0
        %756 = vmatpush1.msra.mxu0 0.0
        %757 = vmatprep.subr.mxu0 0.0
        %758 = vmatpush1.msra.mxu0 0.0
        %759 = vmatprep.subr.mxu0 0.0
        %760 = vmatpush1.msra.mxu0 0.0
        %761 = vmatprep.subr.mxu0 0.0
        %762 = vmatpush1.msra.mxu0 0.0
        %763 = vmatprep.subr.mxu0 0.0
        %764 = vmatpush1.msra.mxu0 0.0
        %765 = vmatprep.subr.mxu0 0.0
        %766 = vmatpush1.msra.mxu0 0.0
        %767 = vmatprep.subr.mxu0 0.0
        %768 = vmatpush1.msra.mxu0 0.0
        %769 = vmatprep.subr.mxu0 0.0
        %770 = vmatpush1.msra.mxu0 0.0
        %771 = vmatprep.subr.mxu0 0.0
        %772 = vmatpush1.msra.mxu0 0.0
        %773 = vmatprep.subr.mxu0 0.0
        %774 = vmatpush1.msra.mxu0 0.0
        %775 = vmatprep.subr.mxu0 0.0
        %776 = vmatpush1.msra.mxu0 0.0
        %777 = vmatprep.subr.mxu0 0.0
        %778 = vmatpush1.msra.mxu0 0.0
        %779 = vmatprep.subr.mxu0 0.0
        %780 = vmatpush1.msra.mxu0 0.0
        %781 = vmatprep.subr.mxu0 0.0
        %782 = vmatpush1.msra.mxu0 0.0
        %783 = vmatprep.subr.mxu0 0.0
        %784 = vmatpush1.msra.mxu0 0.0
        %785 = vmatprep.subr.mxu0 0.0
        %786 = vmatpush1.msra.mxu0 0.0
        %787 = vmatprep.subr.mxu0 0.0
        %788 = vmatpush1.msra.mxu0 0.0
        %789 = vmatprep.subr.mxu0 0.0
        %790 = vmatpush1.msra.mxu0 0.0
        %791 = vmatprep.mubr.f32.mxu0 0.0
        %792 = vmatmul.mubr.f32.gmra.mrb[0].mxu0 %v725
        %v793 = vpop.f32.mrb[0].mxu0
        %v794 = vadd.f32 %v722, %v793
        %v795 = vpop.f32.mrb[0].mxu0
        %796 = vdwg.mxu0
        %v797 = vld [vmem:[%s529] sm:$0xff]
        %v798 = vld [vmem:[%s6] sm:$0xff]
        %v799 = vld [vmem:[#allocation8] sm:$0x1]
        %v801 = vlaneseq
        %v802 = vshrl.u32 %v801, 7
        %v803 = vsub.s32 0, %v802
        %v804 = vrot.slane %v799, %v803
        %v806 = vadd.f32 %v804, %v709
        %vm807 = vcmask 64512
        %v809 = vsel %vm807, %v797, 0
        %811 = vmatprep.subr.mxu0 0.0
        %812 = vmatpush1.msra.mxu0 %v798
        %813 = vmatprep.subr.mxu0 0.0
        %814 = vmatpush1.msra.mxu0 0.0
        %815 = vmatprep.subr.mxu0 0.0
        %816 = vmatpush1.msra.mxu0 0.0
        %817 = vmatprep.subr.mxu0 0.0
        %818 = vmatpush1.msra.mxu0 0.0
        %819 = vmatprep.subr.mxu0 0.0
        %820 = vmatpush1.msra.mxu0 0.0
        %821 = vmatprep.subr.mxu0 0.0
        %822 = vmatpush1.msra.mxu0 0.0
        %823 = vmatprep.subr.mxu0 0.0
        %824 = vmatpush1.msra.mxu0 0.0
        %825 = vmatprep.subr.mxu0 0.0
        %826 = vmatpush1.msra.mxu0 0.0
        %827 = vmatprep.subr.mxu0 0.0
        %828 = vmatpush1.msra.mxu0 0.0
        %829 = vmatprep.subr.mxu0 0.0
        %830 = vmatpush1.msra.mxu0 0.0
        %831 = vmatprep.subr.mxu0 0.0
        %832 = vmatpush1.msra.mxu0 0.0
        %833 = vmatprep.subr.mxu0 0.0
        %834 = vmatpush1.msra.mxu0 0.0
        %835 = vmatprep.subr.mxu0 0.0
        %836 = vmatpush1.msra.mxu0 0.0
        %837 = vmatprep.subr.mxu0 0.0
        %838 = vmatpush1.msra.mxu0 0.0
        %839 = vmatprep.subr.mxu0 0.0
        %840 = vmatpush1.msra.mxu0 0.0
        %841 = vmatprep.subr.mxu0 0.0
        %842 = vmatpush1.msra.mxu0 0.0
        %843 = vmatprep.subr.mxu0 0.0
        %844 = vmatpush1.msra.mxu0 0.0
        %845 = vmatprep.subr.mxu0 0.0
        %846 = vmatpush1.msra.mxu0 0.0
        %847 = vmatprep.subr.mxu0 0.0
        %848 = vmatpush1.msra.mxu0 0.0
        %849 = vmatprep.subr.mxu0 0.0
        %850 = vmatpush1.msra.mxu0 0.0
        %851 = vmatprep.subr.mxu0 0.0
        %852 = vmatpush1.msra.mxu0 0.0
        %853 = vmatprep.subr.mxu0 0.0
        %854 = vmatpush1.msra.mxu0 0.0
        %855 = vmatprep.subr.mxu0 0.0
        %856 = vmatpush1.msra.mxu0 0.0
        %857 = vmatprep.subr.mxu0 0.0
        %858 = vmatpush1.msra.mxu0 0.0
        %859 = vmatprep.subr.mxu0 0.0
        %860 = vmatpush1.msra.mxu0 0.0
        %861 = vmatprep.subr.mxu0 0.0
        %862 = vmatpush1.msra.mxu0 0.0
        %863 = vmatprep.subr.mxu0 0.0
        %864 = vmatpush1.msra.mxu0 0.0
        %865 = vmatprep.subr.mxu0 0.0
        %866 = vmatpush1.msra.mxu0 0.0
        %867 = vmatprep.subr.mxu0 0.0
        %868 = vmatpush1.msra.mxu0 0.0
        %869 = vmatprep.subr.mxu0 0.0
        %870 = vmatpush1.msra.mxu0 0.0
        %871 = vmatprep.subr.mxu0 0.0
        %872 = vmatpush1.msra.mxu0 0.0
        %873 = vmatprep.subr.mxu0 0.0
        %874 = vmatpush1.msra.mxu0 0.0
        %875 = vmatprep.mubr.f32.mxu0 0.0
        %876 = vmatmul.mubr.f32.gmra.mrb[0].mxu0 %v809
        %v877 = vpop.f32.mrb[0].mxu0
        %v878 = vadd.f32 %v806, %v877
        %v879 = vpop.f32.mrb[0].mxu0
        %880 = vdwg.mxu0
        %v881 = vld [vmem:[%s613] sm:$0xff]
        %v882 = vld [vmem:[#allocation10] sm:$0x1]
        %884 = vset.pattern.permute.xlu0 0
        %885 = vperm.xlu0 %884, %v881
        %v886 = vpop.permute.xlu0 %885
        %v889 = vlaneseq
        %v890 = vshrl.u32 %v889, 7
        %v891 = vsub.s32 0, %v890
        %v892 = vrot.slane %v882, %v891
        %v894 = vmul.f32 %v886, %v892
        %v895 = vld [vmem:[#allocation11] sm:$0x1]
        %v897 = vlaneseq
        %v898 = vshrl.u32 %v897, 7
        %v899 = vsub.s32 0, %v898
        %v900 = vrot.slane %v895, %v899
        %v902 = vadd.f32 %v900, %v709
        %v903 = vadd.f32 %v894, %v902
        %v904 = vld [vmem:[%s11] sm:$0x1]
        %v906 = vlaneseq
        %v907 = vshrl.u32 %v906, 7
        %v908 = vsub.s32 0, %v907
        %v909 = vrot.slane %v904, %v908
        %v911 = vld [vmem:[%s12] sm:$0x1]
        %v913 = vlaneseq
        %v914 = vshrl.u32 %v913, 7
        %v915 = vsub.s32 0, %v914
        %v916 = vrot.slane %v911, %v915
        %918 = vadd.xlane.f32.xlu0 %v903
        %v919 = vpop.xlane.xlu0 %918
        %v920 = vrcp.pop 128.0
        %v921 = vmul.f32 %v919, %v920
        %v922 = vsub.f32 %v903, %v921
        %v923 = vmul.f32 %v922, %v922
        %924 = vadd.xlane.f32.xlu0 %v923
        %v925 = vpop.xlane.xlu0 %924
        %v926 = vmul.f32 %v925, %v920
        %v927 = vadd.f32 %v926, 1e-05
        %v928 = vrsqrt.pop %v927
        %v929 = vmul.f32 %v922, %v928
        %v930 = vmul.f32 %v929, %v909
        %v931 = vadd.f32 %v930, %v916
        %932 = vst [vmem:[%s606] sm:$0xff] %v931
        %933 = vadd.xlane.f32.xlu0 %v794
        %v934 = vpop.xlane.xlu0 %933
        %v935 = vmul.f32 %v934, %v920
        %v936 = vsub.f32 %v794, %v935
        %v937 = vmul.f32 %v936, %v936
        %938 = vadd.xlane.f32.xlu0 %v937
        %v939 = vpop.xlane.xlu0 %938
        %v940 = vmul.f32 %v939, %v920
        %v941 = vadd.f32 %v940, 1e-05
        %v942 = vrsqrt.pop %v941
        %v943 = vmul.f32 %v936, %v942
        %v944 = vmul.f32 %v943, %v909
        %v945 = vadd.f32 %v944, %v916
        %s946 = scalar_lea.vmem %s606, 8 [#allocation13]
        %947 = vst [vmem:[%s946] sm:$0xff] %v945
        %948 = vadd.xlane.f32.xlu0 %v878
        %v949 = vpop.xlane.xlu0 %948
        %v950 = vmul.f32 %v949, %v920
        %v951 = vsub.f32 %v878, %v950
        %v952 = vmul.f32 %v951, %v951
        %953 = vadd.xlane.f32.xlu0 %v952
        %v954 = vpop.xlane.xlu0 %953
        %v955 = vmul.f32 %v954, %v920
        %v956 = vadd.f32 %v955, 1e-05
        %v957 = vrsqrt.pop %v956
        %v958 = vmul.f32 %v951, %v957
        %v959 = vmul.f32 %v958, %v909
        %v960 = vadd.f32 %v959, %v916
        %s961 = scalar_lea.vmem %s606, 16 [#allocation13]
        %962 = vst [vmem:[%s961] sm:$0xff] %v960
        %s963 = sand.u32 %s358, 1
        %s964 = scalar_lea.sflag [#allocation4], %s963
        %s965 = sand.u32 %s358, 1
        %s966 = smul.addr %s965, 24
        %s967 = scalar_lea.vmem [#allocation13], %s966
        // Predicated region
        $region97: #{tpu_custom_call.1} parent=71 // pred_check
          %p968 = pneg %p368
        $region98: #{tpu_custom_call.1} parent=71 // pred_check_branch
          %970 = sbr.rel (%p968) target = $region100
        $region99: #{tpu_custom_call.1} parent=71 // pred_region
          %s972 = ssub.s32 384, 384
          %973 = vsyncadd %s964, %s972
          %s974 = smul.addr %s39, 3
          %s975 = sadd.s32 %s40, %s974
          %s976 = smul.addr %s975, 128
          %s977 = scalar_lea.hbm %s13, %s976
          %s978 = sshll.u32 %s967, 4
          %s979 = int_to_ptr.vmem [resolvable:$true] %s978
          %984 = dma.vmem_to_hbm [thread:$0]  %s979, 384, %s977, %s964, 128, 128, 8
        $region100: #{tpu_custom_call.1} parent=71 // pred_fallthru
          _
      $region72: #{tpu_custom_call.1} parent=5 // pred_fallthru
        _
      %p985 = scmp.le.s32.totalorder 2, %s30
      // Predicated region
      $region101: #{tpu_custom_call.1} parent=5 // pred_check
        %p986 = pneg %p985
      $region102: #{tpu_custom_call.1} parent=5 // pred_check_branch
        %988 = sbr.rel (%p986) target = $region104
      $region103: #{tpu_custom_call.1} parent=5 // pred_region
        %s989 = ssub.s32 %s30, 2
        // Predicated region
        $region105: #{tpu_custom_call.1} parent=103 // pred_check
          %p990 = pneg %p374
        $region106: #{tpu_custom_call.1} parent=103 // pred_check_branch
          %992 = sbr.rel (%p990) target = $region108
        $region107: #{tpu_custom_call.1} parent=103 // pred_region
          %s993 = sand.u32 %s359, 1
          %s994 = scalar_lea.sflag [#allocation4], %s993
          %s995 = sand.u32 %s359, 1
          %s996 = smul.addr %s995, 24
          %s997 = scalar_lea.vmem [#allocation13], %s996
          %998 = dma.done %s994, 384
        $region108: #{tpu_custom_call.1} parent=103 // pred_fallthru
          _
      $region104: #{tpu_custom_call.1} parent=5 // pred_fallthru
        _
    $region6: #{tpu_custom_call.1} parent=1 // loop_footer
      %s34 = sadd.s32 1, %s30
    $region7: #{tpu_custom_call.1} parent=1 // loop_footer_branch
      %29 = sbr.rel target = $region3
    $region8: #{tpu_custom_call.1} parent=1 // loop_exit
      _
    %999 = vsyncpa [#allocation3], 1
    %s1000 = scalar_lea.sflag [#allocation3], 1
    %1001 = vsyncpa %s1000, 1
    %1002 = vsyncpa [#allocation6], 1
    %s1003 = scalar_lea.sflag [#allocation6], 1
    %1004 = vsyncpa %s1003, 1
    %1005 = vsyncpa [#allocation9], 1
    %1006 = vsyncpa [#allocation12], 1
    %1007 = vsyncpa [#allocation4], 1
    %s1008 = scalar_lea.sflag [#allocation4], 1
    %1009 = vsyncpa %s1008, 1

</llo_original>
